<compile_context>
chip_gen: v5e
topology: v5e:2x2
jax: 0.10.0
libtpu: 0.0.40
codegen_flags: <defaults>
</compile_context>

<pallas_src>
import functools

import jax
import jax.numpy as jnp
from jax.experimental import pallas as pl
from jax.experimental.pallas import tpu as pltpu


def _round_up(n, m):
    return ((n + m - 1) // m) * m


def _mlp_kernel(x_ref, w1_ref, b1_ref, w2_ref, b2_ref, w3_ref, b3_ref, o_ref):
    # x_ref: (bb, D) f32 tile of the flattened input; cast to the weights' compute
    # dtype here (VPU cast hides under the DMA). Weights/biases are full arrays and
    # stay VMEM-resident across grid steps. Biases are f32; dots accumulate in f32.
    x = x_ref[...].astype(w1_ref.dtype)
    h1 = jnp.dot(x, w1_ref[...], preferred_element_type=jnp.float32) + b1_ref[...]
    h1 = jnp.maximum(h1, 0.0)
    h2 = jnp.dot(h1.astype(w2_ref.dtype), w2_ref[...],
                 preferred_element_type=jnp.float32) + b2_ref[...]
    h2 = jnp.maximum(h2, 0.0)
    out = jnp.dot(h2.astype(w3_ref.dtype), w3_ref[...],
                  preferred_element_type=jnp.float32) + b3_ref[...]
    o_ref[...] = out.astype(o_ref.dtype)


@functools.partial(jax.jit,
                   static_argnames=("block_b", "compute_dtype", "slice_output"))
def mlp_forward(x_nchw, params, *, block_b=2048, compute_dtype=jnp.bfloat16,
                slice_output=True):
    """Forward pass of the MLP.

    x_nchw: [B, C, H, W] float32. Returns [B, output_dim] f32 (or [B, O_pad] f32 if
    slice_output=False, letting the consumer fuse the cheap slice downstream).
    """
    w1, b1, w2, b2, w3, b3 = params
    B = x_nchw.shape[0]
    # flatten(x, 1)  (plain JAX glue; no-copy reshape)
    x = x_nchw.reshape(B, -1)
    D = x.shape[1]
    H1 = w1.shape[1]
    H2 = w2.shape[1]
    O = w3.shape[1]

    # Weights are tiny (few hundred KiB) and VMEM-resident: cast them once in the
    # wrapper. x stays f32 and is cast INSIDE the kernel (see _mlp_kernel).
    if compute_dtype is not None:
        w1 = w1.astype(compute_dtype)
        w2 = w2.astype(compute_dtype)
        w3 = w3.astype(compute_dtype)
    w_itemsize = jnp.dtype(w1.dtype).itemsize

    # Lane-pad the final projection so the output tile is 128-lane dense
    # (unmasked stores). Padding cost is negligible (w3 is H2 x O).
    O_pad = max(128, _round_up(O, 128))
    if O_pad != O:
        w3 = jnp.pad(w3, ((0, 0), (0, O_pad - O)))
        b3 = jnp.pad(b3, ((0, 0), (0, O_pad - O)))

    # Batch tile: large (default 2048) to amortize per-step overhead, clipped to B
    # and rounded to 8 sublanes (x is streamed f32). No padding of x: Pallas handles
    # the ragged last tile; each output row depends only on its own input row, so
    # garbage OOB rows are dropped harmlessly on writeback.
    bb = _round_up(min(block_b, B), 8)
    # v7x megacore: prefer >= 2 grid steps so both TensorCores get work.
    if bb >= B and B >= 16:
        bb_half = _round_up(-(-B // 2), 8)
        if bb_half < B:
            bb = bb_half
    grid = (pl.cdiv(B, bb),)

    # Explicit scoped-VMEM budget: double-buffered f32 x tile + f32 output tile +
    # (double-buffered, but resident) weights/biases, with ~20% + 4 MiB headroom.
    # Keeps big tiles legal on v5e (16 MiB default scoped) and safe on v7x (64 MiB).
    vmem_bytes = (
        2 * bb * D * 4                                    # x tile (f32), 2 buffers
        + 2 * bb * O_pad * 4                              # out tile (f32), 2 buffers
        + 2 * (D * H1 + H1 * H2 + H2 * O_pad) * w_itemsize  # weights
        + 2 * (H1 + H2 + O_pad) * 4                       # biases (f32)
    )
    vmem_limit = min(110 * 1024 * 1024, int(vmem_bytes * 1.2) + (4 << 20))

    cost = pl.CostEstimate(
        flops=2 * B * (D * H1 + H1 * H2 + H2 * O_pad),
        transcendentals=0,
        bytes_accessed=(B * D * 4                          # x (f32 read)
                        + (D * H1 + H1 * H2 + H2 * O_pad) * w_itemsize
                        + (H1 + H2 + O_pad) * 4
                        + B * O_pad * 4),                  # output (f32 write)
    )

    out = pl.pallas_call(
        _mlp_kernel,
        out_shape=jax.ShapeDtypeStruct((B, O_pad), jnp.float32),
        grid_spec=pl.GridSpec(
            grid=grid,
            in_specs=[
                pl.BlockSpec((bb, D), lambda i: (i, 0)),       # x tile (f32, batch-streamed)
                pl.BlockSpec((D, H1), lambda i: (0, 0)),       # w1 (full, resident)
                pl.BlockSpec((1, H1), lambda i: (0, 0)),       # b1
                pl.BlockSpec((H1, H2), lambda i: (0, 0)),      # w2
                pl.BlockSpec((1, H2), lambda i: (0, 0)),       # b2
                pl.BlockSpec((H2, O_pad), lambda i: (0, 0)),   # w3 (lane-padded)
                pl.BlockSpec((1, O_pad), lambda i: (0, 0)),    # b3 (lane-padded)
            ],
            out_specs=pl.BlockSpec((bb, O_pad), lambda i: (i, 0)),
        ),
        compiler_params=pltpu.CompilerParams(
            dimension_semantics=("parallel",),
            vmem_limit_bytes=vmem_limit,
        ),
        cost_estimate=cost,
    )(x, w1, b1, w2, b2, w3, b3)

    if slice_output and O_pad != O:
        out = out[:, :O]
    return out


def init_params(key, input_dim, hidden_dim1, hidden_dim2, output_dim):
    """Deterministic init mimicking nn.Linear defaults (uniform +-1/sqrt(fan_in)).
    Weights stored as [in_features, out_features] (transposed vs. PyTorch)."""
    ks = jax.random.split(key, 6)

    def linear(kw, kb, fan_in, fan_out):
        bound = 1.0 / jnp.sqrt(jnp.float32(fan_in))
        w = jax.random.uniform(kw, (fan_in, fan_out), jnp.float32, -bound, bound)
        b = jax.random.uniform(kb, (1, fan_out), jnp.float32, -bound, bound)
        return w, b

    w1, b1 = linear(ks[0], ks[1], input_dim, hidden_dim1)
    w2, b2 = linear(ks[2], ks[3], hidden_dim1, hidden_dim2)
    w3, b3 = linear(ks[4], ks[5], hidden_dim2, output_dim)
    return (w1, b1, w2, b2, w3, b3)


def mlp_reference(x_nchw, params, compute_dtype=jnp.bfloat16):
    """Pure-JAX reference mirroring the kernel's dtype handling (bf16 compute, f32 accum)."""
    w1, b1, w2, b2, w3, b3 = params
    x = x_nchw.reshape(x_nchw.shape[0], -1)
    if compute_dtype is not None:
        x = x.astype(compute_dtype)
        w1 = w1.astype(compute_dtype)
        w2 = w2.astype(compute_dtype)
        w3 = w3.astype(compute_dtype)
    h1 = jnp.maximum(
        jnp.dot(x, w1, preferred_element_type=jnp.float32) + b1, 0.0)
    h2 = jnp.maximum(
        jnp.dot(h1.astype(w2.dtype), w2, preferred_element_type=jnp.float32) + b2, 0.0)
    return jnp.dot(h2.astype(w3.dtype), w3, preferred_element_type=jnp.float32) + b3


if __name__ == "__main__":
    key = jax.random.PRNGKey(0)
    k_x, k_p = jax.random.split(key)

    # Small shapes consistent with the module: x [B, C, H, W] -> input_dim = C*H*W
    B, C, H, W = 2, 4, 16, 16
    input_dim = C * H * W          # 1024
    hidden_dim1 = 64
    hidden_dim2 = 32
    output_dim = 10

    x = jax.random.normal(k_x, (B, C, H, W), jnp.float32)
    params = init_params(k_p, input_dim, hidden_dim1, hidden_dim2, output_dim)

    out = mlp_forward(x, params)
    out = jax.block_until_ready(out)

    ref = mlp_reference(x, params)
    assert out.shape == (B, output_dim), out.shape
    assert out.dtype == jnp.float32, out.dtype
    assert jnp.allclose(out, ref, atol=1e-2, rtol=1e-2), "mismatch vs reference"

    print("KERNEL_OK")
</pallas_src>

<mosaic_0001>
module attributes {stable_mosaic.version = 11 : i64} {
  func.func @_mlp_kernel(%arg0: i32, %arg1: memref<8x1024xf32, #tpu.memory_space<vmem>>, %arg2: memref<1024x64xbf16, #tpu.memory_space<vmem>>, %arg3: memref<1x64xf32, #tpu.memory_space<vmem>>, %arg4: memref<64x32xbf16, #tpu.memory_space<vmem>>, %arg5: memref<1x32xf32, #tpu.memory_space<vmem>>, %arg6: memref<32x128xbf16, #tpu.memory_space<vmem>>, %arg7: memref<1x128xf32, #tpu.memory_space<vmem>>, %arg8: memref<8x128xf32, #tpu.memory_space<vmem>>) attributes {dimension_semantics = [#tpu.dimension_semantics<parallel>], iteration_bounds = array<i64: 1>, scalar_prefetch = 0 : i64, scratch_operands = 0 : i64, tpu.core_type = #tpu.core_type<tc>, window_params = [{transform_indices = @transform_0, window_bounds = array<i64: 8, 1024>}, {pipeline_mode = #tpu.pipeline_mode<synchronous>, transform_indices = @transform_1, window_bounds = array<i64: 1024, 64>}, {pipeline_mode = #tpu.pipeline_mode<synchronous>, transform_indices = @transform_2, window_bounds = array<i64: 1, 64>}, {pipeline_mode = #tpu.pipeline_mode<synchronous>, transform_indices = @transform_3, window_bounds = array<i64: 64, 32>}, {pipeline_mode = #tpu.pipeline_mode<synchronous>, transform_indices = @transform_4, window_bounds = array<i64: 1, 32>}, {pipeline_mode = #tpu.pipeline_mode<synchronous>, transform_indices = @transform_5, window_bounds = array<i64: 32, 128>}, {pipeline_mode = #tpu.pipeline_mode<synchronous>, transform_indices = @transform_6, window_bounds = array<i64: 1, 128>}, {transform_indices = @transform_7, window_bounds = array<i64: 8, 128>}]} {
    %c0 = arith.constant 0 : index
    %c0_0 = arith.constant 0 : index
    %0 = vector.load %arg1[%c0, %c0_0] : memref<8x1024xf32, #tpu.memory_space<vmem>>, vector<8x1024xf32>
    %1 = arith.truncf %0 : vector<8x1024xf32> to vector<8x1024xbf16>
    %c0_1 = arith.constant 0 : index
    %c0_2 = arith.constant 0 : index
    %2 = vector.load %arg2[%c0_1, %c0_2] : memref<1024x64xbf16, #tpu.memory_space<vmem>>, vector<1024x64xbf16>
    %cst = arith.constant dense<0.000000e+00> : vector<8x64xf32>
    %3 = tpu.matmul %1, %2, %cst {dimension_numbers = #tpu.dot_dimension_numbers<[1], [0], [0], [1], [0, 0, 1, 1], [], []>} : vector<8x1024xbf16>, vector<1024x64xbf16>, vector<8x64xf32> -> vector<8x64xf32>
    %c0_3 = arith.constant 0 : index
    %c0_4 = arith.constant 0 : index
    %4 = vector.load %arg3[%c0_3, %c0_4] : memref<1x64xf32, #tpu.memory_space<vmem>>, vector<1x64xf32>
    %5 = vector.broadcast %4 : vector<1x64xf32> to vector<8x64xf32>
    %6 = arith.addf %3, %5 : vector<8x64xf32>
    %cst_5 = arith.constant 0.000000e+00 : f32
    %7 = vector.broadcast %cst_5 : f32 to vector<8x64xf32>
    %8 = arith.maximumf %6, %7 : vector<8x64xf32>
    %9 = arith.truncf %8 : vector<8x64xf32> to vector<8x64xbf16>
    %c0_6 = arith.constant 0 : index
    %c0_7 = arith.constant 0 : index
    %10 = vector.load %arg4[%c0_6, %c0_7] : memref<64x32xbf16, #tpu.memory_space<vmem>>, vector<64x32xbf16>
    %cst_8 = arith.constant dense<0.000000e+00> : vector<8x32xf32>
    %11 = tpu.matmul %9, %10, %cst_8 {dimension_numbers = #tpu.dot_dimension_numbers<[1], [0], [0], [1], [0, 0, 1, 1], [], []>} : vector<8x64xbf16>, vector<64x32xbf16>, vector<8x32xf32> -> vector<8x32xf32>
    %c0_9 = arith.constant 0 : index
    %c0_10 = arith.constant 0 : index
    %12 = vector.load %arg5[%c0_9, %c0_10] : memref<1x32xf32, #tpu.memory_space<vmem>>, vector<1x32xf32>
    %13 = vector.broadcast %12 : vector<1x32xf32> to vector<8x32xf32>
    %14 = arith.addf %11, %13 : vector<8x32xf32>
    %cst_11 = arith.constant 0.000000e+00 : f32
    %15 = vector.broadcast %cst_11 : f32 to vector<8x32xf32>
    %16 = arith.maximumf %14, %15 : vector<8x32xf32>
    %17 = arith.truncf %16 : vector<8x32xf32> to vector<8x32xbf16>
    %c0_12 = arith.constant 0 : index
    %c0_13 = arith.constant 0 : index
    %18 = vector.load %arg6[%c0_12, %c0_13] : memref<32x128xbf16, #tpu.memory_space<vmem>>, vector<32x128xbf16>
    %cst_14 = arith.constant dense<0.000000e+00> : vector<8x128xf32>
    %19 = tpu.matmul %17, %18, %cst_14 {dimension_numbers = #tpu.dot_dimension_numbers<[1], [0], [0], [1], [0, 0, 1, 1], [], []>} : vector<8x32xbf16>, vector<32x128xbf16>, vector<8x128xf32> -> vector<8x128xf32>
    %c0_15 = arith.constant 0 : index
    %c0_16 = arith.constant 0 : index
    %20 = vector.load %arg7[%c0_15, %c0_16] : memref<1x128xf32, #tpu.memory_space<vmem>>, vector<1x128xf32>
    %21 = vector.broadcast %20 : vector<1x128xf32> to vector<8x128xf32>
    %22 = arith.addf %19, %21 : vector<8x128xf32>
    %c0_17 = arith.constant 0 : index
    %c0_18 = arith.constant 0 : index
    %23 = vector.load %arg8[%c0_17, %c0_18] : memref<8x128xf32, #tpu.memory_space<vmem>>, vector<8x128xf32>
    tpu.vector_store %arg8[%c0_17, %c0_18], %22 {strides = array<i32>} : memref<8x128xf32, #tpu.memory_space<vmem>>, vector<8x128xf32>,
    return
  }
  func.func @transform_0(%arg0: i32) -> (i32, i32) {
    %c0_i32 = arith.constant 0 : i32
    %c0_i32_0 = arith.constant 0 : i32
    return %arg0, %c0_i32 : i32, i32
  }
  func.func @transform_1(%arg0: i32) -> (i32, i32) {
    %c0_i32 = arith.constant 0 : i32
    %c0_i32_0 = arith.constant 0 : i32
    %c0_i32_1 = arith.constant 0 : i32
    return %c0_i32, %c0_i32_0 : i32, i32
  }
  func.func @transform_2(%arg0: i32) -> (i32, i32) {
    %c0_i32 = arith.constant 0 : i32
    %c0_i32_0 = arith.constant 0 : i32
    %c0_i32_1 = arith.constant 0 : i32
    return %c0_i32, %c0_i32_0 : i32, i32
  }
  func.func @transform_3(%arg0: i32) -> (i32, i32) {
    %c0_i32 = arith.constant 0 : i32
    %c0_i32_0 = arith.constant 0 : i32
    %c0_i32_1 = arith.constant 0 : i32
    return %c0_i32, %c0_i32_0 : i32, i32
  }
  func.func @transform_4(%arg0: i32) -> (i32, i32) {
    %c0_i32 = arith.constant 0 : i32
    %c0_i32_0 = arith.constant 0 : i32
    %c0_i32_1 = arith.constant 0 : i32
    return %c0_i32, %c0_i32_0 : i32, i32
  }
  func.func @transform_5(%arg0: i32) -> (i32, i32) {
    %c0_i32 = arith.constant 0 : i32
    %c0_i32_0 = arith.constant 0 : i32
    %c0_i32_1 = arith.constant 0 : i32
    return %c0_i32, %c0_i32_0 : i32, i32
  }
  func.func @transform_6(%arg0: i32) -> (i32, i32) {
    %c0_i32 = arith.constant 0 : i32
    %c0_i32_0 = arith.constant 0 : i32
    %c0_i32_1 = arith.constant 0 : i32
    return %c0_i32, %c0_i32_0 : i32, i32
  }
  func.func @transform_7(%arg0: i32) -> (i32, i32) {
    %c0_i32 = arith.constant 0 : i32
    %c0_i32_0 = arith.constant 0 : i32
    return %arg0, %c0_i32 : i32, i32
  }
}

</mosaic_0001>

<llo_original>
// kernel: mlp_forward.1
$region0: #{mlp_forward.1}
  #allocation0 [shape = 'u32[]', space=smem, size = 0x4, offset = 0x4, fixed_abs, tag = 'smem constant byte address 0x4 - core index']
  #allocation1 [shape = 'u32[72,128]{1,0:T(1,128)}', space=vmem, size = 0x9000, scoped, tag = 'internal scratch']
  %s0 = inlined_call_operand.vmem [shape: f32[2,1024], index: 0, kind: input, shape index: {}]
  %s1 = inlined_call_operand.vmem [shape: bf16[1024,64], index: 1, kind: input, shape index: {}]
  %s2 = inlined_call_operand.vmem [shape: f32[1,64], index: 2, kind: input, shape index: {}]
  %s3 = inlined_call_operand.vmem [shape: bf16[64,32], index: 3, kind: input, shape index: {}]
  %s4 = inlined_call_operand.vmem [shape: f32[1,32], index: 4, kind: input, shape index: {}]
  %s5 = inlined_call_operand.vmem [shape: bf16[32,128], index: 5, kind: input, shape index: {}]
  %s6 = inlined_call_operand.vmem [shape: f32[1,128], index: 6, kind: input, shape index: {}]
  %s7 = inlined_call_operand.hbm [shape: f32[2,128], index: 7, kind: output, shape index: {}]
  %s8 = sld [smem:[#allocation0]]
  $region38: #{mlp_forward.1} parent=0
    _
  %s10 = ssub.s32 1, %s8
  %s11 = scalar_select 0, %s10, %s8
  $region1: #{mlp_forward.1} parent=0
    #allocation2 [shape = 'u8[4096]{0}', space=vmem, size = 0x1000, scoped, tag = 'output window, operand 0, single buffered']
    #allocation3 [shape = 's32[1]{0}', space=sflag, size = 0x4, scoped, tag = 'scoped memory for mlp_forward.1']
    %12 = vsyncpa [#allocation3], 0
    // Predicated region
    $region2: #{mlp_forward.1} parent=1 // pred_check
      _
    $region3: #{mlp_forward.1} parent=1 // pred_check_branch
      %14 = sbr.rel (0) target = $region5
    $region4: #{mlp_forward.1} parent=1 // pred_region
      _
    $region5: #{mlp_forward.1} parent=1 // pred_fallthru
      _
    // Predicated region
    $region6: #{mlp_forward.1} parent=1 // pred_check
      _
    $region7: #{mlp_forward.1} parent=1 // pred_check_branch
      %16 = sbr.rel (0) target = $region9
    $region8: #{mlp_forward.1} parent=1 // pred_region
      _
    $region9: #{mlp_forward.1} parent=1 // pred_fallthru
      _
    // Predicated region
    $region10: #{mlp_forward.1} parent=1 // pred_check
      _
    $region11: #{mlp_forward.1} parent=1 // pred_check_branch
      %18 = sbr.rel (0) target = $region13
    $region12: #{mlp_forward.1} parent=1 // pred_region
      _
    $region13: #{mlp_forward.1} parent=1 // pred_fallthru
      _
    // Predicated region
    $region14: #{mlp_forward.1} parent=1 // pred_check
      _
    $region15: #{mlp_forward.1} parent=1 // pred_check_branch
      %20 = sbr.rel (0) target = $region17
    $region16: #{mlp_forward.1} parent=1 // pred_region
      _
    $region17: #{mlp_forward.1} parent=1 // pred_fallthru
      _
    // Predicated region
    $region18: #{mlp_forward.1} parent=1 // pred_check
      _
    $region19: #{mlp_forward.1} parent=1 // pred_check_branch
      %22 = sbr.rel (0) target = $region21
    $region20: #{mlp_forward.1} parent=1 // pred_region
      _
    $region21: #{mlp_forward.1} parent=1 // pred_fallthru
      _
    // Predicated region
    $region22: #{mlp_forward.1} parent=1 // pred_check
      _
    $region23: #{mlp_forward.1} parent=1 // pred_check_branch
      %24 = sbr.rel (0) target = $region25
    $region24: #{mlp_forward.1} parent=1 // pred_region
      _
    $region25: #{mlp_forward.1} parent=1 // pred_fallthru
      _
    // Predicated region
    $region26: #{mlp_forward.1} parent=1 // pred_check
      _
    $region27: #{mlp_forward.1} parent=1 // pred_check_branch
      %26 = sbr.rel (0) target = $region29
    $region28: #{mlp_forward.1} parent=1 // pred_region
      _
    $region29: #{mlp_forward.1} parent=1 // pred_fallthru
      _
    %v28 = vld [vmem:[%s0] sm:$0xff]
    %v29 = vld [vmem:[%s0 + $0x8] sm:$0xff]
    %v30 = vld [vmem:[%s0 + $0x10] sm:$0xff]
    %v31 = vld [vmem:[%s0 + $0x18] sm:$0xff]
    %v32 = vld [vmem:[%s0 + $0x20] sm:$0xff]
    %v33 = vld [vmem:[%s0 + $0x28] sm:$0xff]
    %v34 = vld [vmem:[%s0 + $0x30] sm:$0xff]
    %v35 = vld [vmem:[%s0 + $0x38] sm:$0xff]
    %44 = vst [vmem:[#allocation1] ss:$4 sm:$0xff] %v28
    %s45 = scalar_lea.vmem [#allocation1], 1
    %46 = vst [vmem:[%s45] ss:$4 sm:$0xff] %v30
    %s47 = scalar_lea.vmem [#allocation1], 2
    %48 = vst [vmem:[%s47] ss:$4 sm:$0xff] %v32
    %s49 = scalar_lea.vmem [#allocation1], 3
    %50 = vst [vmem:[%s49] ss:$4 sm:$0xff] %v34
    %s51 = scalar_lea.vmem [#allocation1], 32
    %52 = vst [vmem:[%s51] ss:$4 sm:$0xff] %v29
    %s53 = scalar_lea.vmem [#allocation1], 33
    %54 = vst [vmem:[%s53] ss:$4 sm:$0xff] %v31
    %s55 = scalar_lea.vmem [#allocation1], 34
    %56 = vst [vmem:[%s55] ss:$4 sm:$0xff] %v33
    %s57 = scalar_lea.vmem [#allocation1], 35
    %58 = vst [vmem:[%s57] ss:$4 sm:$0xff] %v35
    %v59 = vld.sshfl [vmem:[#allocation1] sm:$0xff pattern:$0x73625140]
    %v60 = vld.sshfl [vmem:[#allocation1 + $0x8] sm:$0xff pattern:$0x73625140]
    %v61 = vld.sshfl [vmem:[#allocation1 + $0x10] sm:$0xff pattern:$0x73625140]
    %v62 = vld.sshfl [vmem:[#allocation1 + $0x18] sm:$0xff pattern:$0x73625140]
    %v63 = vld.sshfl [vmem:[#allocation1 + $0x20] sm:$0xff pattern:$0x73625140]
    %v64 = vld.sshfl [vmem:[#allocation1 + $0x28] sm:$0xff pattern:$0x73625140]
    %v65 = vld.sshfl [vmem:[#allocation1 + $0x30] sm:$0xff pattern:$0x73625140]
    %v66 = vld.sshfl [vmem:[#allocation1 + $0x38] sm:$0xff pattern:$0x73625140]
    %v75 = vpack.c.bf16 %v59, %v59
    %v76 = vpack.c.bf16 %v60, %v60
    %v77 = vpack.c.bf16 %v61, %v61
    %v78 = vpack.c.bf16 %v62, %v62
    %v79 = vpack.c.bf16 %v63, %v63
    %v80 = vpack.c.bf16 %v64, %v64
    %v81 = vpack.c.bf16 %v65, %v65
    %v82 = vpack.c.bf16 %v66, %v66
    %v83 = vld [vmem:[%s1] sm:$0xf]
    %v84 = vld [vmem:[%s1 + $0x4] sm:$0xf]
    %v85 = vld [vmem:[%s1 + $0x8] sm:$0xf]
    %v86 = vld [vmem:[%s1 + $0xc] sm:$0xf]
    %v87 = vld [vmem:[%s1 + $0x10] sm:$0xf]
    %v88 = vld [vmem:[%s1 + $0x14] sm:$0xf]
    %v89 = vld [vmem:[%s1 + $0x18] sm:$0xf]
    %v90 = vld [vmem:[%s1 + $0x1c] sm:$0xf]
    %v91 = vld [vmem:[%s1 + $0x20] sm:$0xf]
    %v92 = vld [vmem:[%s1 + $0x24] sm:$0xf]
    %v93 = vld [vmem:[%s1 + $0x28] sm:$0xf]
    %v94 = vld [vmem:[%s1 + $0x2c] sm:$0xf]
    %v95 = vld [vmem:[%s1 + $0x30] sm:$0xf]
    %v96 = vld [vmem:[%s1 + $0x34] sm:$0xf]
    %v97 = vld [vmem:[%s1 + $0x38] sm:$0xf]
    %v98 = vld [vmem:[%s1 + $0x3c] sm:$0xf]
    %v99 = vld [vmem:[%s1 + $0x40] sm:$0xf]
    %v100 = vld [vmem:[%s1 + $0x44] sm:$0xf]
    %v101 = vld [vmem:[%s1 + $0x48] sm:$0xf]
    %v102 = vld [vmem:[%s1 + $0x4c] sm:$0xf]
    %v103 = vld [vmem:[%s1 + $0x50] sm:$0xf]
    %v104 = vld [vmem:[%s1 + $0x54] sm:$0xf]
    %v105 = vld [vmem:[%s1 + $0x58] sm:$0xf]
    %v106 = vld [vmem:[%s1 + $0x5c] sm:$0xf]
    %v107 = vld [vmem:[%s1 + $0x60] sm:$0xf]
    %v108 = vld [vmem:[%s1 + $0x64] sm:$0xf]
    %v109 = vld [vmem:[%s1 + $0x68] sm:$0xf]
    %v110 = vld [vmem:[%s1 + $0x6c] sm:$0xf]
    %v111 = vld [vmem:[%s1 + $0x70] sm:$0xf]
    %v112 = vld [vmem:[%s1 + $0x74] sm:$0xf]
    %v113 = vld [vmem:[%s1 + $0x78] sm:$0xf]
    %v114 = vld [vmem:[%s1 + $0x7c] sm:$0xf]
    %v115 = vld [vmem:[%s1 + $0x80] sm:$0xf]
    %v116 = vld [vmem:[%s1 + $0x84] sm:$0xf]
    %v117 = vld [vmem:[%s1 + $0x88] sm:$0xf]
    %v118 = vld [vmem:[%s1 + $0x8c] sm:$0xf]
    %v119 = vld [vmem:[%s1 + $0x90] sm:$0xf]
    %v120 = vld [vmem:[%s1 + $0x94] sm:$0xf]
    %v121 = vld [vmem:[%s1 + $0x98] sm:$0xf]
    %v122 = vld [vmem:[%s1 + $0x9c] sm:$0xf]
    %v123 = vld [vmem:[%s1 + $0xa0] sm:$0xf]
    %v124 = vld [vmem:[%s1 + $0xa4] sm:$0xf]
    %v125 = vld [vmem:[%s1 + $0xa8] sm:$0xf]
    %v126 = vld [vmem:[%s1 + $0xac] sm:$0xf]
    %v127 = vld [vmem:[%s1 + $0xb0] sm:$0xf]
    %v128 = vld [vmem:[%s1 + $0xb4] sm:$0xf]
    %v129 = vld [vmem:[%s1 + $0xb8] sm:$0xf]
    %v130 = vld [vmem:[%s1 + $0xbc] sm:$0xf]
    %v131 = vld [vmem:[%s1 + $0xc0] sm:$0xf]
    %v132 = vld [vmem:[%s1 + $0xc4] sm:$0xf]
    %v133 = vld [vmem:[%s1 + $0xc8] sm:$0xf]
    %v134 = vld [vmem:[%s1 + $0xcc] sm:$0xf]
    %v135 = vld [vmem:[%s1 + $0xd0] sm:$0xf]
    %v136 = vld [vmem:[%s1 + $0xd4] sm:$0xf]
    %v137 = vld [vmem:[%s1 + $0xd8] sm:$0xf]
    %v138 = vld [vmem:[%s1 + $0xdc] sm:$0xf]
    %v139 = vld [vmem:[%s1 + $0xe0] sm:$0xf]
    %v140 = vld [vmem:[%s1 + $0xe4] sm:$0xf]
    %v141 = vld [vmem:[%s1 + $0xe8] sm:$0xf]
    %v142 = vld [vmem:[%s1 + $0xec] sm:$0xf]
    %v143 = vld [vmem:[%s1 + $0xf0] sm:$0xf]
    %v144 = vld [vmem:[%s1 + $0xf4] sm:$0xf]
    %v145 = vld [vmem:[%s1 + $0xf8] sm:$0xf]
    %v146 = vld [vmem:[%s1 + $0xfc] sm:$0xf]
    %v147 = vld [vmem:[%s1 + $0x100] sm:$0xf]
    %v148 = vld [vmem:[%s1 + $0x104] sm:$0xf]
    %v149 = vld [vmem:[%s1 + $0x108] sm:$0xf]
    %v150 = vld [vmem:[%s1 + $0x10c] sm:$0xf]
    %v151 = vld [vmem:[%s1 + $0x110] sm:$0xf]
    %v152 = vld [vmem:[%s1 + $0x114] sm:$0xf]
    %v153 = vld [vmem:[%s1 + $0x118] sm:$0xf]
    %v154 = vld [vmem:[%s1 + $0x11c] sm:$0xf]
    %v155 = vld [vmem:[%s1 + $0x120] sm:$0xf]
    %v156 = vld [vmem:[%s1 + $0x124] sm:$0xf]
    %v157 = vld [vmem:[%s1 + $0x128] sm:$0xf]
    %v158 = vld [vmem:[%s1 + $0x12c] sm:$0xf]
    %v159 = vld [vmem:[%s1 + $0x130] sm:$0xf]
    %v160 = vld [vmem:[%s1 + $0x134] sm:$0xf]
    %v161 = vld [vmem:[%s1 + $0x138] sm:$0xf]
    %v162 = vld [vmem:[%s1 + $0x13c] sm:$0xf]
    %v163 = vld [vmem:[%s1 + $0x140] sm:$0xf]
    %v164 = vld [vmem:[%s1 + $0x144] sm:$0xf]
    %v165 = vld [vmem:[%s1 + $0x148] sm:$0xf]
    %v166 = vld [vmem:[%s1 + $0x14c] sm:$0xf]
    %v167 = vld [vmem:[%s1 + $0x150] sm:$0xf]
    %v168 = vld [vmem:[%s1 + $0x154] sm:$0xf]
    %v169 = vld [vmem:[%s1 + $0x158] sm:$0xf]
    %v170 = vld [vmem:[%s1 + $0x15c] sm:$0xf]
    %v171 = vld [vmem:[%s1 + $0x160] sm:$0xf]
    %v172 = vld [vmem:[%s1 + $0x164] sm:$0xf]
    %v173 = vld [vmem:[%s1 + $0x168] sm:$0xf]
    %v174 = vld [vmem:[%s1 + $0x16c] sm:$0xf]
    %v175 = vld [vmem:[%s1 + $0x170] sm:$0xf]
    %v176 = vld [vmem:[%s1 + $0x174] sm:$0xf]
    %v177 = vld [vmem:[%s1 + $0x178] sm:$0xf]
    %v178 = vld [vmem:[%s1 + $0x17c] sm:$0xf]
    %v179 = vld [vmem:[%s1 + $0x180] sm:$0xf]
    %v180 = vld [vmem:[%s1 + $0x184] sm:$0xf]
    %v181 = vld [vmem:[%s1 + $0x188] sm:$0xf]
    %v182 = vld [vmem:[%s1 + $0x18c] sm:$0xf]
    %v183 = vld [vmem:[%s1 + $0x190] sm:$0xf]
    %v184 = vld [vmem:[%s1 + $0x194] sm:$0xf]
    %v185 = vld [vmem:[%s1 + $0x198] sm:$0xf]
    %v186 = vld [vmem:[%s1 + $0x19c] sm:$0xf]
    %v187 = vld [vmem:[%s1 + $0x1a0] sm:$0xf]
    %v188 = vld [vmem:[%s1 + $0x1a4] sm:$0xf]
    %v189 = vld [vmem:[%s1 + $0x1a8] sm:$0xf]
    %v190 = vld [vmem:[%s1 + $0x1ac] sm:$0xf]
    %v191 = vld [vmem:[%s1 + $0x1b0] sm:$0xf]
    %v192 = vld [vmem:[%s1 + $0x1b4] sm:$0xf]
    %v193 = vld [vmem:[%s1 + $0x1b8] sm:$0xf]
    %v194 = vld [vmem:[%s1 + $0x1bc] sm:$0xf]
    %v195 = vld [vmem:[%s1 + $0x1c0] sm:$0xf]
    %v196 = vld [vmem:[%s1 + $0x1c4] sm:$0xf]
    %v197 = vld [vmem:[%s1 + $0x1c8] sm:$0xf]
    %v198 = vld [vmem:[%s1 + $0x1cc] sm:$0xf]
    %v199 = vld [vmem:[%s1 + $0x1d0] sm:$0xf]
    %v200 = vld [vmem:[%s1 + $0x1d4] sm:$0xf]
    %v201 = vld [vmem:[%s1 + $0x1d8] sm:$0xf]
    %v202 = vld [vmem:[%s1 + $0x1dc] sm:$0xf]
    %v203 = vld [vmem:[%s1 + $0x1e0] sm:$0xf]
    %v204 = vld [vmem:[%s1 + $0x1e4] sm:$0xf]
    %v205 = vld [vmem:[%s1 + $0x1e8] sm:$0xf]
    %v206 = vld [vmem:[%s1 + $0x1ec] sm:$0xf]
    %v207 = vld [vmem:[%s1 + $0x1f0] sm:$0xf]
    %v208 = vld [vmem:[%s1 + $0x1f4] sm:$0xf]
    %v209 = vld [vmem:[%s1 + $0x1f8] sm:$0xf]
    %v210 = vld [vmem:[%s1 + $0x1fc] sm:$0xf]
    %v211 = vld [vmem:[%s2] sm:$0x1]
    %v213 = vperm.slane %v211, 0
    %v343 = vunpack.c.l.b16 %v83
    %v344 = vunpack.c.l.b16 %v84
    %v345 = vunpack.c.l.b16 %v85
    %v346 = vunpack.c.l.b16 %v86
    %v347 = vunpack.c.l.b16 %v87
    %v348 = vunpack.c.l.b16 %v88
    %v349 = vunpack.c.l.b16 %v89
    %v350 = vunpack.c.l.b16 %v90
    %v351 = vunpack.c.l.b16 %v91
    %v352 = vunpack.c.l.b16 %v92
    %v353 = vunpack.c.l.b16 %v93
    %v354 = vunpack.c.l.b16 %v94
    %v355 = vunpack.c.l.b16 %v95
    %v356 = vunpack.c.l.b16 %v96
    %v357 = vunpack.c.l.b16 %v97
    %v358 = vunpack.c.l.b16 %v98
    %v359 = vunpack.c.l.b16 %v99
    %v360 = vunpack.c.l.b16 %v100
    %v361 = vunpack.c.l.b16 %v101
    %v362 = vunpack.c.l.b16 %v102
    %v363 = vunpack.c.l.b16 %v103
    %v364 = vunpack.c.l.b16 %v104
    %v365 = vunpack.c.l.b16 %v105
    %v366 = vunpack.c.l.b16 %v106
    %v367 = vunpack.c.l.b16 %v107
    %v368 = vunpack.c.l.b16 %v108
    %v369 = vunpack.c.l.b16 %v109
    %v370 = vunpack.c.l.b16 %v110
    %v371 = vunpack.c.l.b16 %v111
    %v372 = vunpack.c.l.b16 %v112
    %v373 = vunpack.c.l.b16 %v113
    %v374 = vunpack.c.l.b16 %v114
    %v375 = vunpack.c.l.b16 %v115
    %v376 = vunpack.c.l.b16 %v116
    %v377 = vunpack.c.l.b16 %v117
    %v378 = vunpack.c.l.b16 %v118
    %v379 = vunpack.c.l.b16 %v119
    %v380 = vunpack.c.l.b16 %v120
    %v381 = vunpack.c.l.b16 %v121
    %v382 = vunpack.c.l.b16 %v122
    %v383 = vunpack.c.l.b16 %v123
    %v384 = vunpack.c.l.b16 %v124
    %v385 = vunpack.c.l.b16 %v125
    %v386 = vunpack.c.l.b16 %v126
    %v387 = vunpack.c.l.b16 %v127
    %v388 = vunpack.c.l.b16 %v128
    %v389 = vunpack.c.l.b16 %v129
    %v390 = vunpack.c.l.b16 %v130
    %v391 = vunpack.c.l.b16 %v131
    %v392 = vunpack.c.l.b16 %v132
    %v393 = vunpack.c.l.b16 %v133
    %v394 = vunpack.c.l.b16 %v134
    %v395 = vunpack.c.l.b16 %v135
    %v396 = vunpack.c.l.b16 %v136
    %v397 = vunpack.c.l.b16 %v137
    %v398 = vunpack.c.l.b16 %v138
    %v399 = vunpack.c.l.b16 %v139
    %v400 = vunpack.c.l.b16 %v140
    %v401 = vunpack.c.l.b16 %v141
    %v402 = vunpack.c.l.b16 %v142
    %v403 = vunpack.c.l.b16 %v143
    %v404 = vunpack.c.l.b16 %v144
    %v405 = vunpack.c.l.b16 %v145
    %v406 = vunpack.c.l.b16 %v146
    %v407 = vunpack.c.l.b16 %v147
    %v408 = vunpack.c.l.b16 %v148
    %v409 = vunpack.c.l.b16 %v149
    %v410 = vunpack.c.l.b16 %v150
    %v411 = vunpack.c.l.b16 %v151
    %v412 = vunpack.c.l.b16 %v152
    %v413 = vunpack.c.l.b16 %v153
    %v414 = vunpack.c.l.b16 %v154
    %v415 = vunpack.c.l.b16 %v155
    %v416 = vunpack.c.l.b16 %v156
    %v417 = vunpack.c.l.b16 %v157
    %v418 = vunpack.c.l.b16 %v158
    %v419 = vunpack.c.l.b16 %v159
    %v420 = vunpack.c.l.b16 %v160
    %v421 = vunpack.c.l.b16 %v161
    %v422 = vunpack.c.l.b16 %v162
    %v423 = vunpack.c.l.b16 %v163
    %v424 = vunpack.c.l.b16 %v164
    %v425 = vunpack.c.l.b16 %v165
    %v426 = vunpack.c.l.b16 %v166
    %v427 = vunpack.c.l.b16 %v167
    %v428 = vunpack.c.l.b16 %v168
    %v429 = vunpack.c.l.b16 %v169
    %v430 = vunpack.c.l.b16 %v170
    %v431 = vunpack.c.l.b16 %v171
    %v432 = vunpack.c.l.b16 %v172
    %v433 = vunpack.c.l.b16 %v173
    %v434 = vunpack.c.l.b16 %v174
    %v435 = vunpack.c.l.b16 %v175
    %v436 = vunpack.c.l.b16 %v176
    %v437 = vunpack.c.l.b16 %v177
    %v438 = vunpack.c.l.b16 %v178
    %v439 = vunpack.c.l.b16 %v179
    %v440 = vunpack.c.l.b16 %v180
    %v441 = vunpack.c.l.b16 %v181
    %v442 = vunpack.c.l.b16 %v182
    %v443 = vunpack.c.l.b16 %v183
    %v444 = vunpack.c.l.b16 %v184
    %v445 = vunpack.c.l.b16 %v185
    %v446 = vunpack.c.l.b16 %v186
    %v447 = vunpack.c.l.b16 %v187
    %v448 = vunpack.c.l.b16 %v188
    %v449 = vunpack.c.l.b16 %v189
    %v450 = vunpack.c.l.b16 %v190
    %v451 = vunpack.c.l.b16 %v191
    %v452 = vunpack.c.l.b16 %v192
    %v453 = vunpack.c.l.b16 %v193
    %v454 = vunpack.c.l.b16 %v194
    %v455 = vunpack.c.l.b16 %v195
    %v456 = vunpack.c.l.b16 %v196
    %v457 = vunpack.c.l.b16 %v197
    %v458 = vunpack.c.l.b16 %v198
    %v459 = vunpack.c.l.b16 %v199
    %v460 = vunpack.c.l.b16 %v200
    %v461 = vunpack.c.l.b16 %v201
    %v462 = vunpack.c.l.b16 %v202
    %v463 = vunpack.c.l.b16 %v203
    %v464 = vunpack.c.l.b16 %v204
    %v465 = vunpack.c.l.b16 %v205
    %v466 = vunpack.c.l.b16 %v206
    %v467 = vunpack.c.l.b16 %v207
    %v468 = vunpack.c.l.b16 %v208
    %v469 = vunpack.c.l.b16 %v209
    %v470 = vunpack.c.l.b16 %v210
    %v471 = vpack.c.b16 %v344, %v343
    %v472 = vpack.c.b16 %v346, %v345
    %v473 = vpack.c.b16 %v348, %v347
    %v474 = vpack.c.b16 %v350, %v349
    %v475 = vpack.c.b16 %v352, %v351
    %v476 = vpack.c.b16 %v354, %v353
    %v477 = vpack.c.b16 %v356, %v355
    %v478 = vpack.c.b16 %v358, %v357
    %v479 = vpack.c.b16 %v360, %v359
    %v480 = vpack.c.b16 %v362, %v361
    %v481 = vpack.c.b16 %v364, %v363
    %v482 = vpack.c.b16 %v366, %v365
    %v483 = vpack.c.b16 %v368, %v367
    %v484 = vpack.c.b16 %v370, %v369
    %v485 = vpack.c.b16 %v372, %v371
    %v486 = vpack.c.b16 %v374, %v373
    %v487 = vpack.c.b16 %v376, %v375
    %v488 = vpack.c.b16 %v378, %v377
    %v489 = vpack.c.b16 %v380, %v379
    %v490 = vpack.c.b16 %v382, %v381
    %v491 = vpack.c.b16 %v384, %v383
    %v492 = vpack.c.b16 %v386, %v385
    %v493 = vpack.c.b16 %v388, %v387
    %v494 = vpack.c.b16 %v390, %v389
    %v495 = vpack.c.b16 %v392, %v391
    %v496 = vpack.c.b16 %v394, %v393
    %v497 = vpack.c.b16 %v396, %v395
    %v498 = vpack.c.b16 %v398, %v397
    %v499 = vpack.c.b16 %v400, %v399
    %v500 = vpack.c.b16 %v402, %v401
    %v501 = vpack.c.b16 %v404, %v403
    %v502 = vpack.c.b16 %v406, %v405
    %v503 = vpack.c.b16 %v408, %v407
    %v504 = vpack.c.b16 %v410, %v409
    %v505 = vpack.c.b16 %v412, %v411
    %v506 = vpack.c.b16 %v414, %v413
    %v507 = vpack.c.b16 %v416, %v415
    %v508 = vpack.c.b16 %v418, %v417
    %v509 = vpack.c.b16 %v420, %v419
    %v510 = vpack.c.b16 %v422, %v421
    %v511 = vpack.c.b16 %v424, %v423
    %v512 = vpack.c.b16 %v426, %v425
    %v513 = vpack.c.b16 %v428, %v427
    %v514 = vpack.c.b16 %v430, %v429
    %v515 = vpack.c.b16 %v432, %v431
    %v516 = vpack.c.b16 %v434, %v433
    %v517 = vpack.c.b16 %v436, %v435
    %v518 = vpack.c.b16 %v438, %v437
    %v519 = vpack.c.b16 %v440, %v439
    %v520 = vpack.c.b16 %v442, %v441
    %v521 = vpack.c.b16 %v444, %v443
    %v522 = vpack.c.b16 %v446, %v445
    %v523 = vpack.c.b16 %v448, %v447
    %v524 = vpack.c.b16 %v450, %v449
    %v525 = vpack.c.b16 %v452, %v451
    %v526 = vpack.c.b16 %v454, %v453
    %v527 = vpack.c.b16 %v456, %v455
    %v528 = vpack.c.b16 %v458, %v457
    %v529 = vpack.c.b16 %v460, %v459
    %v530 = vpack.c.b16 %v462, %v461
    %v531 = vpack.c.b16 %v464, %v463
    %v532 = vpack.c.b16 %v466, %v465
    %v533 = vpack.c.b16 %v468, %v467
    %v534 = vpack.c.b16 %v470, %v469
    %599 = vmatpush.bf16.msra.mxu0 %v478
    %600 = vmatpush.bf16.msra.mxu0 %v477
    %601 = vmatpush.bf16.msra.mxu0 %v476
    %602 = vmatpush.bf16.msra.mxu0 %v475
    %603 = vmatpush.bf16.msra.mxu0 %v474
    %604 = vmatpush.bf16.msra.mxu0 %v473
    %605 = vmatpush.bf16.msra.mxu0 %v472
    %606 = vmatpush.bf16.msra.mxu0 %v471
    %607 = vmatmul.bf16.gmra.mxu0 %v75
    %v608 = vpop.f32.mrf.mxu0
    %v609 = vadd.f32 %v213, %v608
    %v610 = vpop.f32.mrf.mxu0
    %611 = vdwg.mxu0
    %612 = vmatpush.bf16.msra.mxu0 %v486
    %613 = vmatpush.bf16.msra.mxu0 %v485
    %614 = vmatpush.bf16.msra.mxu0 %v484
    %615 = vmatpush.bf16.msra.mxu0 %v483
    %616 = vmatpush.bf16.msra.mxu0 %v482
    %617 = vmatpush.bf16.msra.mxu0 %v481
    %618 = vmatpush.bf16.msra.mxu0 %v480
    %619 = vmatpush.bf16.msra.mxu0 %v479
    %620 = vmatmul.bf16.gmra.mxu0 %v76
    %v621 = vpop.f32.mrf.mxu0
    %v622 = vadd.f32 %v609, %v621
    %v623 = vpop.f32.mrf.mxu0
    %624 = vdwg.mxu0
    %625 = vmatpush.bf16.msra.mxu0 %v494
    %626 = vmatpush.bf16.msra.mxu0 %v493
    %627 = vmatpush.bf16.msra.mxu0 %v492
    %628 = vmatpush.bf16.msra.mxu0 %v491
    %629 = vmatpush.bf16.msra.mxu0 %v490
    %630 = vmatpush.bf16.msra.mxu0 %v489
    %631 = vmatpush.bf16.msra.mxu0 %v488
    %632 = vmatpush.bf16.msra.mxu0 %v487
    %633 = vmatmul.bf16.gmra.mxu0 %v77
    %v634 = vpop.f32.mrf.mxu0
    %v635 = vadd.f32 %v622, %v634
    %v636 = vpop.f32.mrf.mxu0
    %637 = vdwg.mxu0
    %638 = vmatpush.bf16.msra.mxu0 %v502
    %639 = vmatpush.bf16.msra.mxu0 %v501
    %640 = vmatpush.bf16.msra.mxu0 %v500
    %641 = vmatpush.bf16.msra.mxu0 %v499
    %642 = vmatpush.bf16.msra.mxu0 %v498
    %643 = vmatpush.bf16.msra.mxu0 %v497
    %644 = vmatpush.bf16.msra.mxu0 %v496
    %645 = vmatpush.bf16.msra.mxu0 %v495
    %646 = vmatmul.bf16.gmra.mxu0 %v78
    %v647 = vpop.f32.mrf.mxu0
    %v648 = vadd.f32 %v635, %v647
    %v649 = vpop.f32.mrf.mxu0
    %650 = vdwg.mxu0
    %651 = vmatpush.bf16.msra.mxu0 %v510
    %652 = vmatpush.bf16.msra.mxu0 %v509
    %653 = vmatpush.bf16.msra.mxu0 %v508
    %654 = vmatpush.bf16.msra.mxu0 %v507
    %655 = vmatpush.bf16.msra.mxu0 %v506
    %656 = vmatpush.bf16.msra.mxu0 %v505
    %657 = vmatpush.bf16.msra.mxu0 %v504
    %658 = vmatpush.bf16.msra.mxu0 %v503
    %659 = vmatmul.bf16.gmra.mxu0 %v79
    %v660 = vpop.f32.mrf.mxu0
    %v661 = vadd.f32 %v648, %v660
    %v662 = vpop.f32.mrf.mxu0
    %663 = vdwg.mxu0
    %664 = vmatpush.bf16.msra.mxu0 %v518
    %665 = vmatpush.bf16.msra.mxu0 %v517
    %666 = vmatpush.bf16.msra.mxu0 %v516
    %667 = vmatpush.bf16.msra.mxu0 %v515
    %668 = vmatpush.bf16.msra.mxu0 %v514
    %669 = vmatpush.bf16.msra.mxu0 %v513
    %670 = vmatpush.bf16.msra.mxu0 %v512
    %671 = vmatpush.bf16.msra.mxu0 %v511
    %672 = vmatmul.bf16.gmra.mxu0 %v80
    %v673 = vpop.f32.mrf.mxu0
    %v674 = vadd.f32 %v661, %v673
    %v675 = vpop.f32.mrf.mxu0
    %676 = vdwg.mxu0
    %677 = vmatpush.bf16.msra.mxu0 %v526
    %678 = vmatpush.bf16.msra.mxu0 %v525
    %679 = vmatpush.bf16.msra.mxu0 %v524
    %680 = vmatpush.bf16.msra.mxu0 %v523
    %681 = vmatpush.bf16.msra.mxu0 %v522
    %682 = vmatpush.bf16.msra.mxu0 %v521
    %683 = vmatpush.bf16.msra.mxu0 %v520
    %684 = vmatpush.bf16.msra.mxu0 %v519
    %685 = vmatmul.bf16.gmra.mxu0 %v81
    %v686 = vpop.f32.mrf.mxu0
    %v687 = vadd.f32 %v674, %v686
    %v688 = vpop.f32.mrf.mxu0
    %689 = vdwg.mxu0
    %690 = vmatpush.bf16.msra.mxu0 %v534
    %691 = vmatpush.bf16.msra.mxu0 %v533
    %692 = vmatpush.bf16.msra.mxu0 %v532
    %693 = vmatpush.bf16.msra.mxu0 %v531
    %694 = vmatpush.bf16.msra.mxu0 %v530
    %695 = vmatpush.bf16.msra.mxu0 %v529
    %696 = vmatpush.bf16.msra.mxu0 %v528
    %697 = vmatpush.bf16.msra.mxu0 %v527
    %698 = vmatmul.bf16.gmra.mxu0 %v82
    %v699 = vpop.f32.mrf.mxu0
    %v700 = vadd.f32 %v687, %v699
    %v701 = vpop.f32.mrf.mxu0
    %702 = vdwg.mxu0
    %v703 = vmax.f32 %v700, 0.0
    %v704 = vpack.c.bf16 %v703, %v703
    %v705 = vld [vmem:[%s3] sm:$0xf]
    %v706 = vld [vmem:[%s3 + $0x4] sm:$0xf]
    %v707 = vld [vmem:[%s3 + $0x8] sm:$0xf]
    %v708 = vld [vmem:[%s3 + $0xc] sm:$0xf]
    %v709 = vld [vmem:[%s3 + $0x10] sm:$0xf]
    %v710 = vld [vmem:[%s3 + $0x14] sm:$0xf]
    %v711 = vld [vmem:[%s3 + $0x18] sm:$0xf]
    %v712 = vld [vmem:[%s3 + $0x1c] sm:$0xf]
    %v713 = vld [vmem:[%s4] sm:$0x1]
    %v715 = vperm.slane %v713, 0
    %v725 = vunpack.c.l.b16 %v705
    %v726 = vunpack.c.l.b16 %v706
    %v727 = vunpack.c.l.b16 %v707
    %v728 = vunpack.c.l.b16 %v708
    %v729 = vunpack.c.l.b16 %v709
    %v730 = vunpack.c.l.b16 %v710
    %v731 = vunpack.c.l.b16 %v711
    %v732 = vunpack.c.l.b16 %v712
    %v733 = vpack.c.b16 %v726, %v725
    %v734 = vpack.c.b16 %v728, %v727
    %v735 = vpack.c.b16 %v730, %v729
    %v736 = vpack.c.b16 %v732, %v731
    %vm741 = vcmask 523264
    %v743 = vsel %vm741, %v704, 0
    %745 = vmatpush.bf16.msra.mxu0 0
    %746 = vmatpush.bf16.msra.mxu0 0
    %747 = vmatpush.bf16.msra.mxu0 0
    %748 = vmatpush.bf16.msra.mxu0 0
    %749 = vmatpush.bf16.msra.mxu0 %v736
    %750 = vmatpush.bf16.msra.mxu0 %v735
    %751 = vmatpush.bf16.msra.mxu0 %v734
    %752 = vmatpush.bf16.msra.mxu0 %v733
    %753 = vmatmul.bf16.gmra.mxu0 %v743
    %v754 = vpop.f32.mrf.mxu0
    %v755 = vadd.f32 %v715, %v754
    %v756 = vpop.f32.mrf.mxu0
    %757 = vdwg.mxu0
    %v758 = vmax.f32 %v755, 0.0
    %v759 = vpack.c.bf16 %v758, %v758
    %v760 = vld [vmem:[%s5] sm:$0xf]
    %v761 = vld [vmem:[%s5 + $0x4] sm:$0xf]
    %v762 = vld [vmem:[%s5 + $0x8] sm:$0xf]
    %v763 = vld [vmem:[%s5 + $0xc] sm:$0xf]
    %v764 = vld [vmem:[%s6] sm:$0x1]
    %v766 = vperm.slane %v764, 0
    %v772 = vunpack.c.l.b16 %v760
    %v773 = vunpack.c.l.b16 %v761
    %v774 = vunpack.c.l.b16 %v762
    %v775 = vunpack.c.l.b16 %v763
    %v776 = vpack.c.b16 %v773, %v772
    %v777 = vpack.c.b16 %v775, %v774
    %vm780 = vcmask 261120
    %v782 = vsel %vm780, %v759, 0
    %784 = vmatpush.bf16.msra.mxu0 0
    %785 = vmatpush.bf16.msra.mxu0 0
    %786 = vmatpush.bf16.msra.mxu0 0
    %787 = vmatpush.bf16.msra.mxu0 0
    %788 = vmatpush.bf16.msra.mxu0 0
    %789 = vmatpush.bf16.msra.mxu0 0
    %790 = vmatpush.bf16.msra.mxu0 %v777
    %791 = vmatpush.bf16.msra.mxu0 %v776
    %792 = vmatmul.bf16.gmra.mxu0 %v782
    %v793 = vpop.f32.mrf.mxu0
    %v794 = vadd.f32 %v766, %v793
    %v795 = vpop.f32.mrf.mxu0
    %796 = vdwg.mxu0
    %797 = vst [vmem:[#allocation2] sm:$0xff] %v794
    // Predicated region
    $region30: #{mlp_forward.1} parent=1 // pred_check
      _
    $region31: #{mlp_forward.1} parent=1 // pred_check_branch
      %799 = sbr.rel (0) target = $region33
    $region32: #{mlp_forward.1} parent=1 // pred_region
      %801 = vsyncadd [#allocation3], 96
      %s802 = sshll.u32 [#allocation2], 4
      %s803 = int_to_ptr.vmem [resolvable:$true] %s802
      %s804 = sshll.u32 %s7, 4
      %s805 = int_to_ptr.hbm [resolvable:$true] %s804
      %810 = dma.vmem_to_hbm [thread:$0]  %s803, 32, %s805, [#allocation3], 32, 32, 2
    $region33: #{mlp_forward.1} parent=1 // pred_fallthru
      _
    // Predicated region
    $region34: #{mlp_forward.1} parent=1 // pred_check
      _
    $region35: #{mlp_forward.1} parent=1 // pred_check_branch
      %812 = sbr.rel (0) target = $region37
    $region36: #{mlp_forward.1} parent=1 // pred_region
      %814 = dma.done [#allocation3], 128
    $region37: #{mlp_forward.1} parent=1 // pred_fallthru
      _
    %815 = vsyncpa [#allocation3], 1

</llo_original>
